<compile_context>
chip_gen: v5e
topology: v5e:2x2
jax: 0.10.0
libtpu: 0.0.40
codegen_flags: <defaults>
</compile_context>

<pallas_src>
import functools
import math

import jax
import jax.numpy as jnp
from jax.experimental import pallas as pl
from jax.experimental.pallas import tpu as pltpu


# ---------------------------------------------------------------------------
# Positional-encoding table (identical math to the PyTorch __init__).
# ---------------------------------------------------------------------------
def _build_pe(d_model, max_seq_length):
    position = jnp.arange(max_seq_length, dtype=jnp.float32)[:, None]
    div_term = jnp.exp(
        jnp.arange(0, d_model, 2, dtype=jnp.float32) * (-(math.log(10000.0) / d_model))
    )
    pe = jnp.zeros((max_seq_length, d_model), dtype=jnp.float32)
    pe = pe.at[:, 0::2].set(jnp.sin(position * div_term))
    pe = pe.at[:, 1::2].set(jnp.cos(position * div_term))
    return pe


# ---------------------------------------------------------------------------
# BlockSpec helpers.
# ---------------------------------------------------------------------------
def _row_spec(s, d):
    # One batch row per grid step; leading batch dim squeezed out of the
    # kernel ref (perf feedback: drop the [None, :, :] broadcast).
    return pl.BlockSpec((None, s, d), lambda b: (b, 0, 0))


def _const_spec(shape):
    # Constant block index across the grid -> Pallas does not re-issue the
    # DMA after the first grid step; weights / LN params stay in VMEM.
    nd = len(shape)
    return pl.BlockSpec(shape, lambda b: (0,) * nd)


_PARALLEL = pltpu.CompilerParams(dimension_semantics=("parallel",))


# ---------------------------------------------------------------------------
# Kernel 1: fused embedding lookup + positional encoding (PE add fused away).
# Token ids are scalar-prefetched into SMEM; the gather is a one-hot matmul
# on the MXU, and pe[:S] is added in the same VMEM tile before store.
# ---------------------------------------------------------------------------
def _embed_pe_kernel(ids_ref, emb_ref, pe_ref, o_ref, *, seq_len, vocab):
    b = pl.program_id(0)
    pos_iota = jax.lax.broadcasted_iota(jnp.int32, (seq_len, vocab), 0)
    tok_iota = jax.lax.broadcasted_iota(jnp.int32, (seq_len, vocab), 1)
    onehot = jnp.zeros((seq_len, vocab), jnp.float32)
    for s in range(seq_len):  # static, small seq_len
        tok = ids_ref[b, s]
        onehot = onehot + jnp.where((pos_iota == s) & (tok_iota == tok), 1.0, 0.0)
    rows = jnp.dot(onehot, emb_ref[...], preferred_element_type=jnp.float32)
    o_ref[...] = (rows + pe_ref[...]).astype(o_ref.dtype)


def embed_pe(ids, emb_table, pe):
    B, S = ids.shape
    V, D = emb_table.shape
    assert pe.shape[0] >= S, "max_seq_length must be >= sequence length"
    pe_s = pe[:S].astype(emb_table.dtype)  # cast + static slice (glue)
    kernel = functools.partial(_embed_pe_kernel, seq_len=S, vocab=V)
    return pl.pallas_call(
        kernel,
        out_shape=jax.ShapeDtypeStruct((B, S, D), emb_table.dtype),
        grid_spec=pltpu.PrefetchScalarGridSpec(
            num_scalar_prefetch=1,
            grid=(B,),
            in_specs=[
                pl.BlockSpec((V, D), lambda b, ids_ref: (0, 0)),
                pl.BlockSpec((S, D), lambda b, ids_ref: (0, 0)),
            ],
            out_specs=pl.BlockSpec((None, S, D), lambda b, ids_ref: (b, 0, 0)),
        ),
        compiler_params=_PARALLEL,
    )(ids, emb_table, pe_s)


# ---------------------------------------------------------------------------
# Kernel 2: fused multi-head attention + residual + LayerNorm (one batch row
# per grid step).  Mask is 1.0 = keep, 0.0 = masked (PyTorch masked_fill).
# ---------------------------------------------------------------------------
def _mha_addnorm_kernel(q_ref, kv_ref, mask_ref, wq_ref, bq_ref, wk_ref, bk_ref,
                        wv_ref, bv_ref, wo_ref, bo_ref, gamma_ref, beta_ref,
                        o_ref, *, num_heads, d_k, eps=1e-5):
    x = q_ref[...]
    kv = kv_ref[...]
    q = jnp.dot(x, wq_ref[...], preferred_element_type=jnp.float32) + bq_ref[...]
    k = jnp.dot(kv, wk_ref[...], preferred_element_type=jnp.float32) + bk_ref[...]
    v = jnp.dot(kv, wv_ref[...], preferred_element_type=jnp.float32) + bv_ref[...]
    mask = mask_ref[...]
    scale = 1.0 / math.sqrt(d_k)

    heads = []
    for h in range(num_heads):  # static unrolled loop over heads
        lo = h * d_k
        qh = q[:, lo:lo + d_k]
        kh = k[:, lo:lo + d_k]
        vh = v[:, lo:lo + d_k]
        s = jax.lax.dot_general(qh, kh, (((1,), (1,)), ((), ())),
                                preferred_element_type=jnp.float32) * scale
        s = jnp.where(mask == 0.0, -1e9, s)
        s = s - jnp.max(s, axis=-1, keepdims=True)
        p = jnp.exp(s)
        p = p / jnp.sum(p, axis=-1, keepdims=True)
        heads.append(jnp.dot(p, vh, preferred_element_type=jnp.float32))
    attn = jnp.concatenate(heads, axis=-1)
    out = jnp.dot(attn, wo_ref[...], preferred_element_type=jnp.float32) + bo_ref[...]

    # TODO(synk): dropout is identity at inference; training-mode dropout not implemented.
    z = x + out
    mu = jnp.mean(z, axis=-1, keepdims=True)
    var = jnp.mean(jnp.square(z - mu), axis=-1, keepdims=True)
    zn = (z - mu) * jax.lax.rsqrt(var + eps)
    o_ref[...] = (zn * gamma_ref[...] + beta_ref[...]).astype(o_ref.dtype)


def mha_addnorm(q, kv, mask, p, ln, num_heads):
    B, Sq, D = q.shape
    Sk = kv.shape[1]
    d_k = D // num_heads
    kernel = functools.partial(_mha_addnorm_kernel, num_heads=num_heads, d_k=d_k)
    return pl.pallas_call(
        kernel,
        out_shape=jax.ShapeDtypeStruct((B, Sq, D), q.dtype),
        grid=(B,),
        in_specs=[
            _row_spec(Sq, D),                                    # q input
            _row_spec(Sk, D),                                    # kv input
            pl.BlockSpec((None, Sq, Sk), lambda b: (b, 0, 0)),   # mask
            _const_spec((D, D)), _const_spec((1, D)),            # wq, bq
            _const_spec((D, D)), _const_spec((1, D)),            # wk, bk
            _const_spec((D, D)), _const_spec((1, D)),            # wv, bv
            _const_spec((D, D)), _const_spec((1, D)),            # wo, bo
            _const_spec((1, D)), _const_spec((1, D)),            # gamma, beta
        ],
        out_specs=_row_spec(Sq, D),
        compiler_params=_PARALLEL,
    )(q, kv, mask, p["wq"], p["bq"], p["wk"], p["bk"], p["wv"], p["bv"],
      p["wo"], p["bo"], ln["gamma"], ln["beta"])


# ---------------------------------------------------------------------------
# Kernel 3: fused position-wise FFN + residual + LayerNorm.
# ---------------------------------------------------------------------------
def _ffn_addnorm_kernel(x_ref, w1_ref, b1_ref, w2_ref, b2_ref, gamma_ref,
                        beta_ref, o_ref, *, eps=1e-5):
    x = x_ref[...]
    h = jnp.dot(x, w1_ref[...], preferred_element_type=jnp.float32) + b1_ref[...]
    h = jnp.maximum(h, 0.0)
    f = jnp.dot(h, w2_ref[...], preferred_element_type=jnp.float32) + b2_ref[...]
    z = x + f
    mu = jnp.mean(z, axis=-1, keepdims=True)
    var = jnp.mean(jnp.square(z - mu), axis=-1, keepdims=True)
    zn = (z - mu) * jax.lax.rsqrt(var + eps)
    o_ref[...] = (zn * gamma_ref[...] + beta_ref[...]).astype(o_ref.dtype)


def ffn_addnorm(x, p, ln):
    B, S, D = x.shape
    F = p["w1"].shape[1]
    return pl.pallas_call(
        _ffn_addnorm_kernel,
        out_shape=jax.ShapeDtypeStruct((B, S, D), x.dtype),
        grid=(B,),
        in_specs=[
            _row_spec(S, D),
            _const_spec((D, F)), _const_spec((1, F)),
            _const_spec((F, D)), _const_spec((1, D)),
            _const_spec((1, D)), _const_spec((1, D)),
        ],
        out_specs=_row_spec(S, D),
        compiler_params=_PARALLEL,
    )(x, p["w1"], p["b1"], p["w2"], p["b2"], ln["gamma"], ln["beta"])


# ---------------------------------------------------------------------------
# Kernel 4: final vocabulary projection.
# ---------------------------------------------------------------------------
def _linear_kernel(x_ref, w_ref, b_ref, o_ref):
    o_ref[...] = (jnp.dot(x_ref[...], w_ref[...],
                          preferred_element_type=jnp.float32)
                  + b_ref[...]).astype(o_ref.dtype)


def final_linear(x, p):
    B, S, D = x.shape
    V = p["w"].shape[1]
    return pl.pallas_call(
        _linear_kernel,
        out_shape=jax.ShapeDtypeStruct((B, S, V), x.dtype),
        grid=(B,),
        in_specs=[_row_spec(S, D), _const_spec((D, V)), _const_spec((1, V))],
        out_specs=_row_spec(S, V),
        compiler_params=_PARALLEL,
    )(x, p["w"], p["b"])


# ---------------------------------------------------------------------------
# Mask generation (plain JAX glue, mirrors Transformer.generate_mask).
# Masks are broadcast to [B, S_q, S_k] float (1.0 keep / 0.0 masked).
# ---------------------------------------------------------------------------
def generate_masks(src, target):
    B, Ss = src.shape
    St = target.shape[1]
    src_keep = src != 0
    tgt_keep = target != 0
    enc_mask = jnp.broadcast_to(src_keep[:, None, :], (B, Ss, Ss)).astype(jnp.float32)
    cross_mask = jnp.broadcast_to(src_keep[:, None, :], (B, St, Ss)).astype(jnp.float32)
    nopeak = jnp.tril(jnp.ones((St, St), dtype=bool))
    tgt_mask = (tgt_keep[:, :, None] & nopeak[None, :, :]).astype(jnp.float32)
    return enc_mask, cross_mask, tgt_mask


# ---------------------------------------------------------------------------
# Full Transformer forward (inference mode: dropout = identity).
# ---------------------------------------------------------------------------
def transformer_forward(params, src, target, num_heads):
    enc_mask, cross_mask, tgt_mask = generate_masks(src, target)

    enc = embed_pe(src, params["enc_emb"], params["pe"])      # embedding + PE fused
    dec = embed_pe(target, params["dec_emb"], params["pe"])   # embedding + PE fused

    for lp in params["encoder_layers"]:
        enc = mha_addnorm(enc, enc, enc_mask, lp["attn"], lp["ln1"], num_heads)
        enc = ffn_addnorm(enc, lp["ffn"], lp["ln2"])

    for lp in params["decoder_layers"]:
        dec = mha_addnorm(dec, dec, tgt_mask, lp["self_attn"], lp["ln1"], num_heads)
        dec = mha_addnorm(dec, enc, cross_mask, lp["cross_attn"], lp["ln2"], num_heads)
        dec = ffn_addnorm(dec, lp["ffn"], lp["ln3"])

    return final_linear(dec, params["fc"])


# ---------------------------------------------------------------------------
# Parameter init (deterministic) and pure-JAX reference for verification.
# ---------------------------------------------------------------------------
class _KeyGen:
    def __init__(self, key):
        self.key = key

    def __call__(self):
        self.key, sub = jax.random.split(self.key)
        return sub


def _mha_init(kg, d):
    p = {}
    for name in ("q", "k", "v", "o"):
        p["w" + name] = 0.05 * jax.random.normal(kg(), (d, d), jnp.float32)
        p["b" + name] = 0.05 * jax.random.normal(kg(), (1, d), jnp.float32)
    return p


def _ln_init(kg, d):
    return {"gamma": 1.0 + 0.1 * jax.random.normal(kg(), (1, d), jnp.float32),
            "beta": 0.1 * jax.random.normal(kg(), (1, d), jnp.float32)}


def _ffn_init(kg, d, f):
    return {"w1": 0.05 * jax.random.normal(kg(), (d, f), jnp.float32),
            "b1": 0.05 * jax.random.normal(kg(), (1, f), jnp.float32),
            "w2": 0.05 * jax.random.normal(kg(), (f, d), jnp.float32),
            "b2": 0.05 * jax.random.normal(kg(), (1, d), jnp.float32)}


def init_params(kg, src_vocab, tgt_vocab, d_model, num_layers, d_ff, max_seq):
    params = {
        "enc_emb": 0.1 * jax.random.normal(kg(), (src_vocab, d_model), jnp.float32),
        "dec_emb": 0.1 * jax.random.normal(kg(), (tgt_vocab, d_model), jnp.float32),
        "pe": _build_pe(d_model, max_seq),
        "encoder_layers": [],
        "decoder_layers": [],
        "fc": {"w": 0.05 * jax.random.normal(kg(), (d_model, tgt_vocab), jnp.float32),
               "b": 0.05 * jax.random.normal(kg(), (1, tgt_vocab), jnp.float32)},
    }
    for _ in range(num_layers):
        params["encoder_layers"].append({
            "attn": _mha_init(kg, d_model), "ln1": _ln_init(kg, d_model),
            "ffn": _ffn_init(kg, d_model, d_ff), "ln2": _ln_init(kg, d_model),
        })
    for _ in range(num_layers):
        params["decoder_layers"].append({
            "self_attn": _mha_init(kg, d_model), "ln1": _ln_init(kg, d_model),
            "cross_attn": _mha_init(kg, d_model), "ln2": _ln_init(kg, d_model),
            "ffn": _ffn_init(kg, d_model, d_ff), "ln3": _ln_init(kg, d_model),
        })
    return params


def _ref_mha(q, kv, mask, p, num_heads):
    B, Sq, D = q.shape
    Sk = kv.shape[1]
    d_k = D // num_heads
    Q = jnp.einsum("bsd,de->bse", q, p["wq"]) + p["bq"]
    K = jnp.einsum("bsd,de->bse", kv, p["wk"]) + p["bk"]
    V = jnp.einsum("bsd,de->bse", kv, p["wv"]) + p["bv"]
    split = lambda x, S: x.reshape(B, S, num_heads, d_k).transpose(0, 2, 1, 3)
    Qh, Kh, Vh = split(Q, Sq), split(K, Sk), split(V, Sk)
    s = jnp.einsum("bhqd,bhkd->bhqk", Qh, Kh) / math.sqrt(d_k)
    s = jnp.where(mask[:, None, :, :] == 0.0, -1e9, s)
    pr = jax.nn.softmax(s, axis=-1)
    o = jnp.einsum("bhqk,bhkd->bhqd", pr, Vh).transpose(0, 2, 1, 3).reshape(B, Sq, D)
    return jnp.einsum("bsd,de->bse", o, p["wo"]) + p["bo"]


def _ref_ln(x, ln, eps=1e-5):
    mu = jnp.mean(x, -1, keepdims=True)
    var = jnp.mean((x - mu) ** 2, -1, keepdims=True)
    return (x - mu) * jax.lax.rsqrt(var + eps) * ln["gamma"] + ln["beta"]


def _ref_ffn(x, p):
    h = jnp.maximum(jnp.einsum("bsd,df->bsf", x, p["w1"]) + p["b1"], 0.0)
    return jnp.einsum("bsf,fd->bsd", h, p["w2"]) + p["b2"]


def ref_forward(params, src, target, num_heads):
    enc_mask, cross_mask, tgt_mask = generate_masks(src, target)
    enc = params["enc_emb"][src] + params["pe"][: src.shape[1]][None]
    dec = params["dec_emb"][target] + params["pe"][: target.shape[1]][None]
    for lp in params["encoder_layers"]:
        enc = _ref_ln(enc + _ref_mha(enc, enc, enc_mask, lp["attn"], num_heads), lp["ln1"])
        enc = _ref_ln(enc + _ref_ffn(enc, lp["ffn"]), lp["ln2"])
    for lp in params["decoder_layers"]:
        dec = _ref_ln(dec + _ref_mha(dec, dec, tgt_mask, lp["self_attn"], num_heads), lp["ln1"])
        dec = _ref_ln(dec + _ref_mha(dec, enc, cross_mask, lp["cross_attn"], num_heads), lp["ln2"])
        dec = _ref_ln(dec + _ref_ffn(dec, lp["ffn"]), lp["ln3"])
    return jnp.einsum("bsd,dv->bsv", dec, params["fc"]["w"]) + params["fc"]["b"]


if __name__ == "__main__":
    # Small, lane-dense demo shapes (d_model / d_ff / vocab multiples of 128).
    src_vocab = 128
    tgt_vocab = 128
    d_model = 128
    num_heads = 4
    num_layers = 2
    d_ff = 256
    max_seq_length = 16
    B, S = 2, 8

    kg = _KeyGen(jax.random.PRNGKey(0))
    params = init_params(kg, src_vocab, tgt_vocab, d_model, num_layers, d_ff,
                         max_seq_length)

    src = jax.random.randint(kg(), (B, S), 1, src_vocab, dtype=jnp.int32)
    target = jax.random.randint(kg(), (B, S), 1, tgt_vocab, dtype=jnp.int32)
    src = src.at[0, -1].set(0)      # exercise padding masks
    target = target.at[1, -1].set(0)

    out = transformer_forward(params, src, target, num_heads)
    out = jax.block_until_ready(out)

    ref = ref_forward(params, src, target, num_heads)
    assert out.shape == (B, S, tgt_vocab)
    assert bool(jnp.allclose(out, ref, atol=5e-2, rtol=5e-2)), "mismatch vs reference"

    print("KERNEL_OK")
</pallas_src>

<mosaic_0001>
module attributes {stable_mosaic.version = 11 : i64} {
  func.func @_embed_pe_kernel(%arg0: i32, %arg1: memref<2x8xi32, #tpu.memory_space<smem>>, %arg2: memref<128x128xf32, #tpu.memory_space<vmem>>, %arg3: memref<8x128xf32, #tpu.memory_space<vmem>>, %arg4: memref<1x8x128xf32, #tpu.memory_space<vmem>>) attributes {dimension_semantics = [#tpu.dimension_semantics<parallel>], iteration_bounds = array<i64: 2>, scalar_prefetch = 1 : i64, scratch_operands = 0 : i64, tpu.core_type = #tpu.core_type<tc>, window_params = [{pipeline_mode = #tpu.pipeline_mode<synchronous>, transform_indices = @transform_0, window_bounds = array<i64: 128, 128>}, {pipeline_mode = #tpu.pipeline_mode<synchronous>, transform_indices = @transform_1, window_bounds = array<i64: 8, 128>}, {transform_indices = @transform_2, window_bounds = array<i64: 1, 8, 128>}]} {
    %0 = tpu.iota {dimensions = array<i32: 0>} : vector<8x128xi32>
    %1 = tpu.iota {dimensions = array<i32: 1>} : vector<8x128xi32>
    %cst = arith.constant 0.000000e+00 : f32
    %2 = vector.broadcast %cst : f32 to vector<8x128xf32>
    %3 = arith.index_cast %arg0 : i32 to index
    %c0 = arith.constant 0 : index
    %4 = memref.load %arg1[%3, %c0] : memref<2x8xi32, #tpu.memory_space<smem>>
    %c0_i32 = arith.constant 0 : i32
    %5 = vector.broadcast %c0_i32 : i32 to vector<8x128xi32>
    %6 = arith.cmpi eq, %0, %5 : vector<8x128xi32>
    %7 = vector.broadcast %4 : i32 to vector<8x128xi32>
    %8 = arith.cmpi eq, %1, %7 : vector<8x128xi32>
    %9 = arith.andi %6, %8 : vector<8x128xi1>
    %cst_0 = arith.constant 1.000000e+00 : f32
    %cst_1 = arith.constant 0.000000e+00 : f32
    %10 = vector.broadcast %cst_0 : f32 to vector<8x128xf32>
    %11 = vector.broadcast %cst_1 : f32 to vector<8x128xf32>
    %12 = arith.select %9, %10, %11 : vector<8x128xi1>, vector<8x128xf32>
    %13 = arith.addf %2, %12 : vector<8x128xf32>
    %14 = arith.index_cast %arg0 : i32 to index
    %c1 = arith.constant 1 : index
    %15 = memref.load %arg1[%14, %c1] : memref<2x8xi32, #tpu.memory_space<smem>>
    %c1_i32 = arith.constant 1 : i32
    %16 = vector.broadcast %c1_i32 : i32 to vector<8x128xi32>
    %17 = arith.cmpi eq, %0, %16 : vector<8x128xi32>
    %18 = vector.broadcast %15 : i32 to vector<8x128xi32>
    %19 = arith.cmpi eq, %1, %18 : vector<8x128xi32>
    %20 = arith.andi %17, %19 : vector<8x128xi1>
    %cst_2 = arith.constant 1.000000e+00 : f32
    %cst_3 = arith.constant 0.000000e+00 : f32
    %21 = vector.broadcast %cst_2 : f32 to vector<8x128xf32>
    %22 = vector.broadcast %cst_3 : f32 to vector<8x128xf32>
    %23 = arith.select %20, %21, %22 : vector<8x128xi1>, vector<8x128xf32>
    %24 = arith.addf %13, %23 : vector<8x128xf32>
    %25 = arith.index_cast %arg0 : i32 to index
    %c2 = arith.constant 2 : index
    %26 = memref.load %arg1[%25, %c2] : memref<2x8xi32, #tpu.memory_space<smem>>
    %c2_i32 = arith.constant 2 : i32
    %27 = vector.broadcast %c2_i32 : i32 to vector<8x128xi32>
    %28 = arith.cmpi eq, %0, %27 : vector<8x128xi32>
    %29 = vector.broadcast %26 : i32 to vector<8x128xi32>
    %30 = arith.cmpi eq, %1, %29 : vector<8x128xi32>
    %31 = arith.andi %28, %30 : vector<8x128xi1>
    %cst_4 = arith.constant 1.000000e+00 : f32
    %cst_5 = arith.constant 0.000000e+00 : f32
    %32 = vector.broadcast %cst_4 : f32 to vector<8x128xf32>
    %33 = vector.broadcast %cst_5 : f32 to vector<8x128xf32>
    %34 = arith.select %31, %32, %33 : vector<8x128xi1>, vector<8x128xf32>
    %35 = arith.addf %24, %34 : vector<8x128xf32>
    %36 = arith.index_cast %arg0 : i32 to index
    %c3 = arith.constant 3 : index
    %37 = memref.load %arg1[%36, %c3] : memref<2x8xi32, #tpu.memory_space<smem>>
    %c3_i32 = arith.constant 3 : i32
    %38 = vector.broadcast %c3_i32 : i32 to vector<8x128xi32>
    %39 = arith.cmpi eq, %0, %38 : vector<8x128xi32>
    %40 = vector.broadcast %37 : i32 to vector<8x128xi32>
    %41 = arith.cmpi eq, %1, %40 : vector<8x128xi32>
    %42 = arith.andi %39, %41 : vector<8x128xi1>
    %cst_6 = arith.constant 1.000000e+00 : f32
    %cst_7 = arith.constant 0.000000e+00 : f32
    %43 = vector.broadcast %cst_6 : f32 to vector<8x128xf32>
    %44 = vector.broadcast %cst_7 : f32 to vector<8x128xf32>
    %45 = arith.select %42, %43, %44 : vector<8x128xi1>, vector<8x128xf32>
    %46 = arith.addf %35, %45 : vector<8x128xf32>
    %47 = arith.index_cast %arg0 : i32 to index
    %c4 = arith.constant 4 : index
    %48 = memref.load %arg1[%47, %c4] : memref<2x8xi32, #tpu.memory_space<smem>>
    %c4_i32 = arith.constant 4 : i32
    %49 = vector.broadcast %c4_i32 : i32 to vector<8x128xi32>
    %50 = arith.cmpi eq, %0, %49 : vector<8x128xi32>
    %51 = vector.broadcast %48 : i32 to vector<8x128xi32>
    %52 = arith.cmpi eq, %1, %51 : vector<8x128xi32>
    %53 = arith.andi %50, %52 : vector<8x128xi1>
    %cst_8 = arith.constant 1.000000e+00 : f32
    %cst_9 = arith.constant 0.000000e+00 : f32
    %54 = vector.broadcast %cst_8 : f32 to vector<8x128xf32>
    %55 = vector.broadcast %cst_9 : f32 to vector<8x128xf32>
    %56 = arith.select %53, %54, %55 : vector<8x128xi1>, vector<8x128xf32>
    %57 = arith.addf %46, %56 : vector<8x128xf32>
    %58 = arith.index_cast %arg0 : i32 to index
    %c5 = arith.constant 5 : index
    %59 = memref.load %arg1[%58, %c5] : memref<2x8xi32, #tpu.memory_space<smem>>
    %c5_i32 = arith.constant 5 : i32
    %60 = vector.broadcast %c5_i32 : i32 to vector<8x128xi32>
    %61 = arith.cmpi eq, %0, %60 : vector<8x128xi32>
    %62 = vector.broadcast %59 : i32 to vector<8x128xi32>
    %63 = arith.cmpi eq, %1, %62 : vector<8x128xi32>
    %64 = arith.andi %61, %63 : vector<8x128xi1>
    %cst_10 = arith.constant 1.000000e+00 : f32
    %cst_11 = arith.constant 0.000000e+00 : f32
    %65 = vector.broadcast %cst_10 : f32 to vector<8x128xf32>
    %66 = vector.broadcast %cst_11 : f32 to vector<8x128xf32>
    %67 = arith.select %64, %65, %66 : vector<8x128xi1>, vector<8x128xf32>
    %68 = arith.addf %57, %67 : vector<8x128xf32>
    %69 = arith.index_cast %arg0 : i32 to index
    %c6 = arith.constant 6 : index
    %70 = memref.load %arg1[%69, %c6] : memref<2x8xi32, #tpu.memory_space<smem>>
    %c6_i32 = arith.constant 6 : i32
    %71 = vector.broadcast %c6_i32 : i32 to vector<8x128xi32>
    %72 = arith.cmpi eq, %0, %71 : vector<8x128xi32>
    %73 = vector.broadcast %70 : i32 to vector<8x128xi32>
    %74 = arith.cmpi eq, %1, %73 : vector<8x128xi32>
    %75 = arith.andi %72, %74 : vector<8x128xi1>
    %cst_12 = arith.constant 1.000000e+00 : f32
    %cst_13 = arith.constant 0.000000e+00 : f32
    %76 = vector.broadcast %cst_12 : f32 to vector<8x128xf32>
    %77 = vector.broadcast %cst_13 : f32 to vector<8x128xf32>
    %78 = arith.select %75, %76, %77 : vector<8x128xi1>, vector<8x128xf32>
    %79 = arith.addf %68, %78 : vector<8x128xf32>
    %80 = arith.index_cast %arg0 : i32 to index
    %c7 = arith.constant 7 : index
    %81 = memref.load %arg1[%80, %c7] : memref<2x8xi32, #tpu.memory_space<smem>>
    %c7_i32 = arith.constant 7 : i32
    %82 = vector.broadcast %c7_i32 : i32 to vector<8x128xi32>
    %83 = arith.cmpi eq, %0, %82 : vector<8x128xi32>
    %84 = vector.broadcast %81 : i32 to vector<8x128xi32>
    %85 = arith.cmpi eq, %1, %84 : vector<8x128xi32>
    %86 = arith.andi %83, %85 : vector<8x128xi1>
    %cst_14 = arith.constant 1.000000e+00 : f32
    %cst_15 = arith.constant 0.000000e+00 : f32
    %87 = vector.broadcast %cst_14 : f32 to vector<8x128xf32>
    %88 = vector.broadcast %cst_15 : f32 to vector<8x128xf32>
    %89 = arith.select %86, %87, %88 : vector<8x128xi1>, vector<8x128xf32>
    %90 = arith.addf %79, %89 : vector<8x128xf32>
    %c0_16 = arith.constant 0 : index
    %c0_17 = arith.constant 0 : index
    %91 = vector.load %arg2[%c0_16, %c0_17] : memref<128x128xf32, #tpu.memory_space<vmem>>, vector<128x128xf32>
    %cst_18 = arith.constant dense<0.000000e+00> : vector<8x128xf32>
    %92 = tpu.matmul %90, %91, %cst_18 {dimension_numbers = #tpu.dot_dimension_numbers<[1], [0], [0], [1], [0, 0, 1, 1], [], []>} : vector<8x128xf32>, vector<128x128xf32>, vector<8x128xf32> -> vector<8x128xf32>
    %c0_19 = arith.constant 0 : index
    %c0_20 = arith.constant 0 : index
    %93 = vector.load %arg3[%c0_19, %c0_20] : memref<8x128xf32, #tpu.memory_space<vmem>>, vector<8x128xf32>
    %94 = arith.addf %92, %93 : vector<8x128xf32>
    %c0_21 = arith.constant 0 : index
    %c0_22 = arith.constant 0 : index
    %c0_23 = arith.constant 0 : index
    %95 = vector.load %arg4[%c0_21, %c0_22, %c0_23] : memref<1x8x128xf32, #tpu.memory_space<vmem>>, vector<1x8x128xf32>
    %96 = vector.shape_cast %95 : vector<1x8x128xf32> to vector<8x128xf32>
    %97 = vector.shape_cast %94 : vector<8x128xf32> to vector<1x8x128xf32>
    tpu.vector_store %arg4[%c0_21, %c0_22, %c0_23], %97 {strides = array<i32>} : memref<1x8x128xf32, #tpu.memory_space<vmem>>, vector<1x8x128xf32>,
    return
  }
  func.func @transform_0(%arg0: i32, %arg1: memref<2x8xi32, #tpu.memory_space<smem>>) -> (i32, i32) {
    %c0_i32 = arith.constant 0 : i32
    %c0_i32_0 = arith.constant 0 : i32
    %c0_i32_1 = arith.constant 0 : i32
    return %c0_i32, %c0_i32_0 : i32, i32
  }
  func.func @transform_1(%arg0: i32, %arg1: memref<2x8xi32, #tpu.memory_space<smem>>) -> (i32, i32) {
    %c0_i32 = arith.constant 0 : i32
    %c0_i32_0 = arith.constant 0 : i32
    %c0_i32_1 = arith.constant 0 : i32
    return %c0_i32, %c0_i32_0 : i32, i32
  }
  func.func @transform_2(%arg0: i32, %arg1: memref<2x8xi32, #tpu.memory_space<smem>>) -> (i32, i32, i32) {
    %c0_i32 = arith.constant 0 : i32
    %c0_i32_0 = arith.constant 0 : i32
    %c0_i32_1 = arith.constant 0 : i32
    return %arg0, %c0_i32, %c0_i32_0 : i32, i32, i32
  }
}

</mosaic_0001>

<llo_original>
// kernel: tpu_custom_call.1
$region0: #{tpu_custom_call.1}
  #allocation0 [shape = 'u32[]', space=smem, size = 0x4, offset = 0x4, fixed_abs, tag = 'smem constant byte address 0x4 - core index']
  #allocation1 [shape = 'u32[72,128]{1,0:T(1,128)}', space=vmem, size = 0x9000, scoped, tag = 'internal scratch']
  #allocation2 [shape = 's32[1]{0}', space=sflag, size = 0x4, scoped, tag = 'scoped memory for tpu_custom_call.1']
  #allocation3 [shape = 'u8[1024]{0}', space=smem, size = 0x400, scoped, tag = 'prefetched SMEM operand 0']
  %s0 = inlined_call_operand.hbm [shape: s32[2,8], index: 0, kind: input, shape index: {}]
  %s1 = inlined_call_operand.hbm [shape: f32[128,128], index: 1, kind: input, shape index: {}]
  %s2 = inlined_call_operand.hbm [shape: f32[8,128], index: 2, kind: input, shape index: {}]
  %s3 = inlined_call_operand.hbm [shape: f32[2,8,128], index: 3, kind: output, shape index: {}]
  %s4 = sld [smem:[#allocation0]]
  $region49: #{tpu_custom_call.1} parent=0
    _
  %s6 = ssub.s32 1, %s4
  %s7 = scalar_select 0, %s6, %s4
  %s9 = sshll.u32 %s0, 4
  %s10 = int_to_ptr.hbm [resolvable:$true] %s9
  %12 = dma.hbm_to_smem %s10, 32, [#allocation3], [#allocation2]
  %14 = dma.done [#allocation2], 32
  %15 = sfence
  $region1: #{tpu_custom_call.1} parent=0
    #allocation4 [shape = 'u8[65536]{0}', space=vmem, size = 0x10000, scoped, tag = 'input window, operand 1, single buffered']
    #allocation5 [shape = 's32[2]{0}', space=sflag, size = 0x8, scoped, tag = 'scoped memory for tpu_custom_call.1']
    #allocation6 [shape = 's32[2]{0}', space=sflag, size = 0x8, scoped, tag = 'scoped memory for tpu_custom_call.1']
    #allocation7 [shape = 'u8[4096]{0}', space=vmem, size = 0x1000, scoped, tag = 'input window, operand 2, single buffered']
    #allocation8 [shape = 's32[1]{0}', space=sflag, size = 0x4, scoped, tag = 'scoped memory for tpu_custom_call.1']
    #allocation9 [shape = 'u8[8192]{0}', space=vmem, size = 0x2000, scoped, tag = 'output window, operand 0']
    %16 = vsyncpa [#allocation5], 0
    %17 = vsyncpa [#allocation8], 0
    %18 = vsyncpa [#allocation6], 0
    %s19 = scalar_lea.sflag [#allocation6], 1
    %20 = vsyncpa %s19, 0
    loop: start=0, step=1, limit=4
    $region2: #{tpu_custom_call.1} parent=1 // loop_pre_header
      _
    $region3: #{tpu_custom_call.1} parent=1 // loop_header
      %s22 = sphi 0, %s26
      %p23 = scmp.ge.s32.totalorder %s22, 4
      %s30 = sphi 0, %s30
      %s32 = sphi 0, %s30
      %s33 = sphi 0, %s32
      %s47 = sphi 0, %s33
      %s51 = sphi 0, %s51
      %s53 = sphi 0, %s51
      %s54 = sphi 0, %s53
      %s68 = sphi 0, %s54
      %s74 = sphi 0, %s76
      %s77 = sphi 0, %s74
      %s78 = sphi 0, %s77
      %s94 = sphi 0, %s78
    $region4: #{tpu_custom_call.1} parent=1 // loop_header_branch
      %25 = sbr.rel (%p23) target = $region8
    $region5: #{tpu_custom_call.1} parent=1 // loop_body
      %s27 = ssub.s32 %s22, 1
      %s28 = ssub.s32 %s22, 2
      %s29 = sadd.s32 %s22, 1
      %s31 = sadd.s32 %s30, 1
      %p34 = scmp.eq.s32.totalorder %s22, 1
      %p35 = scmp.ne.s32.totalorder %s30, %s32
      %p36 = scmp.eq.s32.totalorder %s22, 0
      %p37 = por %p35, %p36
      %p38 = scmp.ne.s32.totalorder %s30, %s32
      %p39 = scmp.eq.s32.totalorder %s27, 1
      %p40 = por %p38, %p39
      %p41 = scmp.ne.s32.totalorder %s32, %s33
      %p42 = scmp.eq.s32.totalorder %s27, 0
      %p43 = por %p41, %p42
      %p44 = scmp.ne.s32.totalorder %s32, %s33
      %p45 = scmp.eq.s32.totalorder %s28, 1
      %p46 = por %p44, %p45
      %p48 = scmp.ne.s32.totalorder %s33, %s47
      %p49 = scmp.eq.s32.totalorder %s28, 0
      %p50 = por %p48, %p49
      %s52 = sadd.s32 %s51, 1
      %p55 = scmp.eq.s32.totalorder %s22, 1
      %p56 = scmp.ne.s32.totalorder %s51, %s53
      %p57 = scmp.eq.s32.totalorder %s22, 0
      %p58 = por %p56, %p57
      %p59 = scmp.ne.s32.totalorder %s51, %s53
      %p60 = scmp.eq.s32.totalorder %s27, 1
      %p61 = por %p59, %p60
      %p62 = scmp.ne.s32.totalorder %s53, %s54
      %p63 = scmp.eq.s32.totalorder %s27, 0
      %p64 = por %p62, %p63
      %p65 = scmp.ne.s32.totalorder %s53, %s54
      %p66 = scmp.eq.s32.totalorder %s28, 1
      %p67 = por %p65, %p66
      %p69 = scmp.ne.s32.totalorder %s54, %s68
      %p70 = scmp.eq.s32.totalorder %s28, 0
      %p71 = por %p69, %p70
      %s72 = ssub.s32 %s22, %s29
      %p73 = scmp.eq.s32.totalorder %s72, 0
      %s75 = sadd.s32 %s74, 1
      %s76 = scalar_select %p73, %s74, %s75
      %p79 = pneg %p73
      %p80 = scmp.eq.s32.totalorder %s22, 1
      %p81 = por %p79, %p80
      %p82 = scmp.ne.s32.totalorder %s74, %s77
      %p83 = scmp.eq.s32.totalorder %s22, 0
      %p84 = por %p82, %p83
      %p85 = scmp.ne.s32.totalorder %s74, %s77
      %p86 = scmp.eq.s32.totalorder %s27, 1
      %p87 = por %p85, %p86
      %p88 = scmp.ne.s32.totalorder %s77, %s78
      %p89 = scmp.eq.s32.totalorder %s27, 0
      %p90 = por %p88, %p89
      %p91 = scmp.ne.s32.totalorder %s77, %s78
      %p92 = scmp.eq.s32.totalorder %s28, 1
      %p93 = por %p91, %p92
      %p95 = scmp.ne.s32.totalorder %s78, %s94
      %p96 = scmp.eq.s32.totalorder %s28, 0
      %p97 = por %p95, %p96
      %p98 = scmp.le.s32.totalorder 1, %s22
      %p99 = scmp.lt.s32.totalorder %s22, 3
      %p100 = pnand %p98, %p99
      %p101 = pneg %p100
      // Predicated region
      $region9: #{tpu_custom_call.1} parent=5 // pred_check
        _
      $region10: #{tpu_custom_call.1} parent=5 // pred_check_branch
        %103 = sbr.rel (%p100) target = $region12
      $region11: #{tpu_custom_call.1} parent=5 // pred_region
        %s104 = ssub.s32 %s22, 1
        // Predicated region
        $region13: #{tpu_custom_call.1} parent=11 // pred_check
          %p105 = pneg %p43
        $region14: #{tpu_custom_call.1} parent=11 // pred_check_branch
          %107 = sbr.rel (%p105) target = $region16
        $region15: #{tpu_custom_call.1} parent=11 // pred_region
          %109 = vsyncadd [#allocation5], 0
          %s110 = sshll.u32 %s1, 4
          %s111 = int_to_ptr.hbm [resolvable:$true] %s110
          %s112 = sshll.u32 [#allocation4], 4
          %s113 = int_to_ptr.vmem [resolvable:$true] %s112
          %118 = dma.hbm_to_vmem [thread:$0]  %s111, 2048, %s113, [#allocation5], 128, 128, 8
        $region16: #{tpu_custom_call.1} parent=11 // pred_fallthru
          _
        // Predicated region
        $region17: #{tpu_custom_call.1} parent=11 // pred_check
          %p119 = pneg %p64
        $region18: #{tpu_custom_call.1} parent=11 // pred_check_branch
          %121 = sbr.rel (%p119) target = $region20
        $region19: #{tpu_custom_call.1} parent=11 // pred_region
          %123 = vsyncadd [#allocation8], 0
          %s125 = sshll.u32 %s2, 4
          %s126 = int_to_ptr.hbm [resolvable:$true] %s125
          %s127 = sshll.u32 [#allocation7], 4
          %s128 = int_to_ptr.vmem [resolvable:$true] %s127
          %130 = dma.hbm_to_vmem [thread:$0]  %s126, 128, %s128, [#allocation8]
        $region20: #{tpu_custom_call.1} parent=11 // pred_fallthru
          _
      $region12: #{tpu_custom_call.1} parent=5 // pred_fallthru
        _
      %p131 = scmp.lt.s32.totalorder %s22, 2
      // Predicated region
      $region21: #{tpu_custom_call.1} parent=5 // pred_check
        %p132 = pneg %p131
      $region22: #{tpu_custom_call.1} parent=5 // pred_check_branch
        %134 = sbr.rel (%p132) target = $region24
      $region23: #{tpu_custom_call.1} parent=5 // pred_region
        _
      $region24: #{tpu_custom_call.1} parent=5 // pred_fallthru
        _
      %p135 = scmp.le.s32.totalorder 1, %s22
      %p136 = scmp.lt.s32.totalorder %s22, 3
      %p137 = pnand %p135, %p136
      %p138 = pneg %p137
      // Predicated region
      $region25: #{tpu_custom_call.1} parent=5 // pred_check
        _
      $region26: #{tpu_custom_call.1} parent=5 // pred_check_branch
        %140 = sbr.rel (%p137) target = $region28
      $region27: #{tpu_custom_call.1} parent=5 // pred_region
        %s141 = ssub.s32 %s22, 1
        // Predicated region
        $region29: #{tpu_custom_call.1} parent=27 // pred_check
          %p142 = pneg %p43
        $region30: #{tpu_custom_call.1} parent=27 // pred_check_branch
          %144 = sbr.rel (%p142) target = $region32
        $region31: #{tpu_custom_call.1} parent=27 // pred_region
          %146 = dma.done [#allocation5], 2048
        $region32: #{tpu_custom_call.1} parent=27 // pred_fallthru
          _
        // Predicated region
        $region33: #{tpu_custom_call.1} parent=27 // pred_check
          %p147 = pneg %p64
        $region34: #{tpu_custom_call.1} parent=27 // pred_check_branch
          %149 = sbr.rel (%p147) target = $region36
        $region35: #{tpu_custom_call.1} parent=27 // pred_region
          %151 = dma.done [#allocation8], 128
        $region36: #{tpu_custom_call.1} parent=27 // pred_fallthru
          _
        %p152 = pneg %p43
        %p153 = pneg %p40
        %p154 = pneg %p64
        %p155 = pneg %p61
        %p156 = pneg %p90
        %p157 = pneg %p87
        %s158 = sand.u32 %s77, 1
        %s159 = scalar_lea.sflag [#allocation6], %s158
        %s160 = sand.u32 %s77, 1
        %s161 = smul.addr %s160, 8
        %s162 = scalar_lea.vmem [#allocation9], %s161
        %v163 = vlaneseq
        %v164 = vshrl.u32 %v163, 7
        %v165 = vlaneseq
        %v166 = vand.u32 %v165, 127
        %s167 = smul.u32 %s27, 128
        %s168 = sld [smem:[#allocation3 + %s167]]
        %vm169 = vcmp.eq.s32.totalorder %v164, 0
        %v170 = vstv %s168
        %vm171 = vcmp.eq.s32.totalorder %v166, %v170
        %vm172 = vmand %vm169, %vm171
        %v173 = vsel %vm172, 1.0, 0.0
        %v174 = vadd.f32 %v173, 0.0
        %s175 = sadd.s32 %s167, 1
        %s176 = sld [smem:[#allocation3 + %s175]]
        %vm177 = vcmp.eq.s32.totalorder %v164, 1
        %v178 = vstv %s176
        %vm179 = vcmp.eq.s32.totalorder %v166, %v178
        %vm180 = vmand %vm177, %vm179
        %v181 = vsel %vm180, 1.0, 0.0
        %v182 = vadd.f32 %v174, %v181
        %s183 = sadd.s32 %s167, 2
        %s184 = sld [smem:[#allocation3 + %s183]]
        %vm185 = vcmp.eq.s32.totalorder %v164, 2
        %v186 = vstv %s184
        %vm187 = vcmp.eq.s32.totalorder %v166, %v186
        %vm188 = vmand %vm185, %vm187
        %v189 = vsel %vm188, 1.0, 0.0
        %v190 = vadd.f32 %v182, %v189
        %s191 = sadd.s32 %s167, 3
        %s192 = sld [smem:[#allocation3 + %s191]]
        %vm193 = vcmp.eq.s32.totalorder %v164, 3
        %v194 = vstv %s192
        %vm195 = vcmp.eq.s32.totalorder %v166, %v194
        %vm196 = vmand %vm193, %vm195
        %v197 = vsel %vm196, 1.0, 0.0
        %v198 = vadd.f32 %v190, %v197
        %s199 = sadd.s32 %s167, 4
        %s200 = sld [smem:[#allocation3 + %s199]]
        %vm201 = vcmp.eq.s32.totalorder %v164, 4
        %v202 = vstv %s200
        %vm203 = vcmp.eq.s32.totalorder %v166, %v202
        %vm204 = vmand %vm201, %vm203
        %v205 = vsel %vm204, 1.0, 0.0
        %v206 = vadd.f32 %v198, %v205
        %s207 = sadd.s32 %s167, 5
        %s208 = sld [smem:[#allocation3 + %s207]]
        %vm209 = vcmp.eq.s32.totalorder %v164, 5
        %v210 = vstv %s208
        %vm211 = vcmp.eq.s32.totalorder %v166, %v210
        %vm212 = vmand %vm209, %vm211
        %v213 = vsel %vm212, 1.0, 0.0
        %v214 = vadd.f32 %v206, %v213
        %s215 = sadd.s32 %s167, 6
        %s216 = sld [smem:[#allocation3 + %s215]]
        %vm217 = vcmp.eq.s32.totalorder %v164, 6
        %v218 = vstv %s216
        %vm219 = vcmp.eq.s32.totalorder %v166, %v218
        %vm220 = vmand %vm217, %vm219
        %v221 = vsel %vm220, 1.0, 0.0
        %v222 = vadd.f32 %v214, %v221
        %s223 = sadd.s32 %s167, 7
        %s224 = sld [smem:[#allocation3 + %s223]]
        %vm225 = vcmp.eq.s32.totalorder %v164, 7
        %v226 = vstv %s224
        %vm227 = vcmp.eq.s32.totalorder %v166, %v226
        %vm228 = vmand %vm225, %vm227
        %v229 = vsel %vm228, 1.0, 0.0
        %v230 = vadd.f32 %v222, %v229
        %v231 = vld [vmem:[#allocation4] sm:$0xff]
        %v232 = vld [vmem:[#allocation4 + $0x8] sm:$0xff]
        %v233 = vld [vmem:[#allocation4 + $0x10] sm:$0xff]
        %v234 = vld [vmem:[#allocation4 + $0x18] sm:$0xff]
        %v235 = vld [vmem:[#allocation4 + $0x20] sm:$0xff]
        %v236 = vld [vmem:[#allocation4 + $0x28] sm:$0xff]
        %v237 = vld [vmem:[#allocation4 + $0x30] sm:$0xff]
        %v238 = vld [vmem:[#allocation4 + $0x38] sm:$0xff]
        %v239 = vld [vmem:[#allocation4 + $0x40] sm:$0xff]
        %v240 = vld [vmem:[#allocation4 + $0x48] sm:$0xff]
        %v241 = vld [vmem:[#allocation4 + $0x50] sm:$0xff]
        %v242 = vld [vmem:[#allocation4 + $0x58] sm:$0xff]
        %v243 = vld [vmem:[#allocation4 + $0x60] sm:$0xff]
        %v244 = vld [vmem:[#allocation4 + $0x68] sm:$0xff]
        %v245 = vld [vmem:[#allocation4 + $0x70] sm:$0xff]
        %v246 = vld [vmem:[#allocation4 + $0x78] sm:$0xff]
        %v247 = vld [vmem:[#allocation7] sm:$0xff]
        %248 = vmatpush.msra.mxu0 %v246
        %249 = vmatpush.msra.mxu0 %v245
        %250 = vmatpush.msra.mxu0 %v244
        %251 = vmatpush.msra.mxu0 %v243
        %252 = vmatpush.msra.mxu0 %v242
        %253 = vmatpush.msra.mxu0 %v241
        %254 = vmatpush.msra.mxu0 %v240
        %255 = vmatpush.msra.mxu0 %v239
        %256 = vmatpush.msra.mxu0 %v238
        %257 = vmatpush.msra.mxu0 %v237
        %258 = vmatpush.msra.mxu0 %v236
        %259 = vmatpush.msra.mxu0 %v235
        %260 = vmatpush.msra.mxu0 %v234
        %261 = vmatpush.msra.mxu0 %v233
        %262 = vmatpush.msra.mxu0 %v232
        %263 = vmatpush.msra.mxu0 %v231
        %264 = vmatmul.f32.gmra.mxu0 %v230
        %v265 = vpop.f32.mrf.mxu0
        %v266 = vadd.f32 %v247, %v265
        %267 = vdwg.mxu0
        %268 = vst [vmem:[%s162] sm:$0xff] %v266
        %s269 = sand.u32 %s77, 1
        %s270 = scalar_lea.sflag [#allocation6], %s269
        %s271 = sand.u32 %s77, 1
        %s272 = smul.addr %s271, 8
        %s273 = scalar_lea.vmem [#allocation9], %s272
        // Predicated region
        $region37: #{tpu_custom_call.1} parent=27 // pred_check
          %p274 = pneg %p87
        $region38: #{tpu_custom_call.1} parent=27 // pred_check_branch
          %276 = sbr.rel (%p274) target = $region40
        $region39: #{tpu_custom_call.1} parent=27 // pred_region
          %278 = vsyncadd %s270, 0
          %s279 = smul.addr %s27, 8
          %s280 = scalar_lea.hbm %s3, %s279
          %s282 = sshll.u32 %s273, 4
          %s283 = int_to_ptr.vmem [resolvable:$true] %s282
          %s284 = sshll.u32 %s280, 4
          %s285 = int_to_ptr.hbm [resolvable:$true] %s284
          %287 = dma.vmem_to_hbm [thread:$0]  %s283, 128, %s285, %s270
        $region40: #{tpu_custom_call.1} parent=27 // pred_fallthru
          _
      $region28: #{tpu_custom_call.1} parent=5 // pred_fallthru
        _
      %p288 = scmp.le.s32.totalorder 2, %s22
      // Predicated region
      $region41: #{tpu_custom_call.1} parent=5 // pred_check
        %p289 = pneg %p288
      $region42: #{tpu_custom_call.1} parent=5 // pred_check_branch
        %291 = sbr.rel (%p289) target = $region44
      $region43: #{tpu_custom_call.1} parent=5 // pred_region
        %s292 = ssub.s32 %s22, 2
        // Predicated region
        $region45: #{tpu_custom_call.1} parent=43 // pred_check
          %p293 = pneg %p93
        $region46: #{tpu_custom_call.1} parent=43 // pred_check_branch
          %295 = sbr.rel (%p293) target = $region48
        $region47: #{tpu_custom_call.1} parent=43 // pred_region
          %s296 = sand.u32 %s78, 1
          %s297 = scalar_lea.sflag [#allocation6], %s296
          %s298 = sand.u32 %s78, 1
          %s299 = smul.addr %s298, 8
          %s300 = scalar_lea.vmem [#allocation9], %s299
          %302 = dma.done %s297, 128
        $region48: #{tpu_custom_call.1} parent=43 // pred_fallthru
          _
      $region44: #{tpu_custom_call.1} parent=5 // pred_fallthru
        _
    $region6: #{tpu_custom_call.1} parent=1 // loop_footer
      %s26 = sadd.s32 1, %s22
    $region7: #{tpu_custom_call.1} parent=1 // loop_footer_branch
      %21 = sbr.rel target = $region3
    $region8: #{tpu_custom_call.1} parent=1 // loop_exit
      _
    %303 = vsyncpa [#allocation5], 1
    %s304 = scalar_lea.sflag [#allocation5], 1
    %305 = vsyncpa %s304, 1
    %306 = vsyncpa [#allocation8], 1
    %307 = vsyncpa [#allocation6], 1
    %s308 = scalar_lea.sflag [#allocation6], 1
    %309 = vsyncpa %s308, 1

</llo_original>
